<compile_context>
chip_gen: v7x
topology: tpu7x:2x2x1
jax: 0.10.0
libtpu: 0.0.40
codegen_flags: <defaults>
</compile_context>

<pallas_src>
import jax
import jax.numpy as jnp
from jax.experimental import pallas as pl
from jax.experimental.pallas import tpu as pltpu

HIDDEN = 128
OUT_PAD = 128          # lane-dense output slab width (>= a_dim + 1)
TB_MAX = 512           # max batch-tile rows (multiple of 8, VMEM-safe on v7x too)


def _agent_fwd_kernel(x_ref, w1_ref, b1_ref, w2_ref, b2_ref, out_ref):
    # x: [TB, s_dim], w1: [s_dim, 2H], b1: [1, 2H], w2: [2H, OUT_PAD], b2: [1, OUT_PAD]
    x = x_ref[...]
    # fused first layers of both heads: one matmul + one tanh
    h = jnp.tanh(
        jnp.dot(x, w1_ref[...], preferred_element_type=jnp.float32) + b1_ref[...]
    )
    # fused (block-diagonal) second layers -> lane-dense [TB, OUT_PAD] slab
    out_ref[...] = (
        jnp.dot(h, w2_ref[...], preferred_element_type=jnp.float32) + b2_ref[...]
    ).astype(out_ref.dtype)


def pack_params(params, out_pad=OUT_PAD):
    """Fuse the 4 Linear layers into 2 wide weight slabs for the kernel."""
    s_dim, hidden = params["wp1"].shape
    a_dim = params["wp2"].shape[1]
    assert a_dim + 1 <= out_pad
    # first layers side by side: [s_dim, 2H], [1, 2H]
    w1 = jnp.concatenate([params["wp1"], params["wv1"]], axis=1)
    b1 = jnp.concatenate([params["bp1"], params["bv1"]], axis=0)[None, :]
    # second layers block-diagonal into a lane-dense [2H, out_pad] slab
    w2 = jnp.zeros((2 * hidden, out_pad), jnp.float32)
    w2 = w2.at[:hidden, :a_dim].set(params["wp2"])
    w2 = w2.at[hidden:, a_dim:a_dim + 1].set(params["wv2"])
    b2 = jnp.zeros((1, out_pad), jnp.float32)
    b2 = b2.at[0, :a_dim].set(params["bp2"])
    b2 = b2.at[0, a_dim].set(params["bv2"][0])
    return {"w1": w1, "b1": b1, "w2": w2, "b2": b2}


def agent_forward(x, packed, a_dim):
    """Pallas forward of Agent: returns (logits [B, a_dim], values [B, 1])."""
    B, s_dim = x.shape
    w1, b1, w2, b2 = packed["w1"], packed["b1"], packed["w2"], packed["b2"]
    two_h = w1.shape[1]
    out_pad = w2.shape[1]

    # Batch tiling: full batch in one tile for small B, else 512-row parallel tiles
    # (lets Pallas pipeline HBM->VMEM and shard across v7x's two TensorCores).
    tb = B if B <= TB_MAX else TB_MAX
    grid = (pl.cdiv(B, tb),)

    out = pl.pallas_call(
        _agent_fwd_kernel,
        out_shape=jax.ShapeDtypeStruct((B, out_pad), jnp.float32),
        grid=grid,
        in_specs=[
            pl.BlockSpec((tb, s_dim), lambda i: (i, 0)),       # x tile per grid step
            pl.BlockSpec((s_dim, two_h), lambda i: (0, 0)),    # weights stay resident
            pl.BlockSpec((1, two_h), lambda i: (0, 0)),
            pl.BlockSpec((two_h, out_pad), lambda i: (0, 0)),
            pl.BlockSpec((1, out_pad), lambda i: (0, 0)),
        ],
        out_specs=pl.BlockSpec((tb, out_pad), lambda i: (i, 0)),
        compiler_params=pltpu.CompilerParams(
            dimension_semantics=("parallel",),
        ),
    )(x, w1, b1, w2, b2)

    # slice the lane-dense slab back into the module's two outputs
    logits = out[:, :a_dim]
    values = out[:, a_dim:a_dim + 1]
    return logits, values


def init_params(key, s_dim, a_dim, hidden=HIDDEN):
    """Matches set_init: weights ~ N(0, 0.1), biases = 0.
    Weights stored as [in, out] (transpose of PyTorch's [out, in])."""
    k1, k2, k3, k4 = jax.random.split(key, 4)
    std = 0.1
    return {
        "wp1": jax.random.normal(k1, (s_dim, hidden), jnp.float32) * std,
        "bp1": jnp.zeros((hidden,), jnp.float32),
        "wp2": jax.random.normal(k2, (hidden, a_dim), jnp.float32) * std,
        "bp2": jnp.zeros((a_dim,), jnp.float32),
        "wv1": jax.random.normal(k3, (s_dim, hidden), jnp.float32) * std,
        "bv1": jnp.zeros((hidden,), jnp.float32),
        "wv2": jax.random.normal(k4, (hidden, 1), jnp.float32) * std,
        "bv2": jnp.zeros((1,), jnp.float32),
    }


def agent_forward_ref(x, params):
    # Pure-JAX reference on the UNFUSED params (validates the fused packing too).
    pi1 = jnp.tanh(x @ params["wp1"] + params["bp1"][None, :])
    logits = pi1 @ params["wp2"] + params["bp2"][None, :]
    v1 = jnp.tanh(x @ params["wv1"] + params["bv1"][None, :])
    values = v1 @ params["wv2"] + params["bv2"][None, :]
    return logits, values


# TODO(synk): choose_action (Categorical sampling) and loss_func (Python-loop returns /
# smooth_l1) are host-side training utilities, not part of the forward kernel.

if __name__ == "__main__":
    key = jax.random.PRNGKey(0)
    k_param, k_x = jax.random.split(key)

    batch, s_dim, a_dim = 2, 16, 4
    params = init_params(k_param, s_dim, a_dim)
    packed = pack_params(params)
    x = jax.random.normal(k_x, (batch, s_dim), jnp.float32)

    logits, values = agent_forward(x, packed, a_dim)
    jax.block_until_ready((logits, values))

    ref_logits, ref_values = agent_forward_ref(x, params)
    assert logits.shape == (batch, a_dim)
    assert values.shape == (batch, 1)
    assert jnp.allclose(logits, ref_logits, atol=1e-5, rtol=1e-5)
    assert jnp.allclose(values, ref_values, atol=1e-5, rtol=1e-5)

    print("KERNEL_OK")
</pallas_src>

<mosaic_0001>
module attributes {stable_mosaic.version = 11 : i64} {
  func.func @_agent_fwd_kernel(%arg0: i32, %arg1: memref<2x16xf32, #tpu.memory_space<vmem>>, %arg2: memref<16x256xf32, #tpu.memory_space<vmem>>, %arg3: memref<1x256xf32, #tpu.memory_space<vmem>>, %arg4: memref<256x128xf32, #tpu.memory_space<vmem>>, %arg5: memref<1x128xf32, #tpu.memory_space<vmem>>, %arg6: memref<2x128xf32, #tpu.memory_space<vmem>>) attributes {dimension_semantics = [#tpu.dimension_semantics<parallel>], iteration_bounds = array<i64: 1>, scalar_prefetch = 0 : i64, scratch_operands = 0 : i64, tpu.core_type = #tpu.core_type<tc>, window_params = [{transform_indices = @transform_0, window_bounds = array<i64: 2, 16>}, {pipeline_mode = #tpu.pipeline_mode<synchronous>, transform_indices = @transform_1, window_bounds = array<i64: 16, 256>}, {pipeline_mode = #tpu.pipeline_mode<synchronous>, transform_indices = @transform_2, window_bounds = array<i64: 1, 256>}, {pipeline_mode = #tpu.pipeline_mode<synchronous>, transform_indices = @transform_3, window_bounds = array<i64: 256, 128>}, {pipeline_mode = #tpu.pipeline_mode<synchronous>, transform_indices = @transform_4, window_bounds = array<i64: 1, 128>}, {transform_indices = @transform_5, window_bounds = array<i64: 2, 128>}]} {
    %c0 = arith.constant 0 : index
    %c0_0 = arith.constant 0 : index
    %0 = vector.load %arg1[%c0, %c0_0] : memref<2x16xf32, #tpu.memory_space<vmem>>, vector<2x16xf32>
    %c0_1 = arith.constant 0 : index
    %c0_2 = arith.constant 0 : index
    %1 = vector.load %arg2[%c0_1, %c0_2] : memref<16x256xf32, #tpu.memory_space<vmem>>, vector<16x256xf32>
    %cst = arith.constant dense<0.000000e+00> : vector<2x256xf32>
    %2 = tpu.matmul %0, %1, %cst {dimension_numbers = #tpu.dot_dimension_numbers<[1], [0], [0], [1], [0, 0, 1, 1], [], []>} : vector<2x16xf32>, vector<16x256xf32>, vector<2x256xf32> -> vector<2x256xf32>
    %c0_3 = arith.constant 0 : index
    %c0_4 = arith.constant 0 : index
    %3 = vector.load %arg3[%c0_3, %c0_4] : memref<1x256xf32, #tpu.memory_space<vmem>>, vector<1x256xf32>
    %4 = vector.broadcast %3 : vector<1x256xf32> to vector<2x256xf32>
    %5 = arith.addf %2, %4 : vector<2x256xf32>
    %6 = math.tanh %5 : vector<2x256xf32>
    %c0_5 = arith.constant 0 : index
    %c0_6 = arith.constant 0 : index
    %7 = vector.load %arg4[%c0_5, %c0_6] : memref<256x128xf32, #tpu.memory_space<vmem>>, vector<256x128xf32>
    %cst_7 = arith.constant dense<0.000000e+00> : vector<2x128xf32>
    %8 = tpu.matmul %6, %7, %cst_7 {dimension_numbers = #tpu.dot_dimension_numbers<[1], [0], [0], [1], [0, 0, 1, 1], [], []>} : vector<2x256xf32>, vector<256x128xf32>, vector<2x128xf32> -> vector<2x128xf32>
    %c0_8 = arith.constant 0 : index
    %c0_9 = arith.constant 0 : index
    %9 = vector.load %arg5[%c0_8, %c0_9] : memref<1x128xf32, #tpu.memory_space<vmem>>, vector<1x128xf32>
    %10 = vector.broadcast %9 : vector<1x128xf32> to vector<2x128xf32>
    %11 = arith.addf %8, %10 : vector<2x128xf32>
    %c0_10 = arith.constant 0 : index
    %c0_11 = arith.constant 0 : index
    %12 = vector.load %arg6[%c0_10, %c0_11] : memref<2x128xf32, #tpu.memory_space<vmem>>, vector<2x128xf32>
    tpu.vector_store %arg6[%c0_10, %c0_11], %11 {strides = array<i32>} : memref<2x128xf32, #tpu.memory_space<vmem>>, vector<2x128xf32>,
    return
  }
  func.func @transform_0(%arg0: i32) -> (i32, i32) {
    %c0_i32 = arith.constant 0 : i32
    %c0_i32_0 = arith.constant 0 : i32
    return %arg0, %c0_i32 : i32, i32
  }
  func.func @transform_1(%arg0: i32) -> (i32, i32) {
    %c0_i32 = arith.constant 0 : i32
    %c0_i32_0 = arith.constant 0 : i32
    %c0_i32_1 = arith.constant 0 : i32
    return %c0_i32, %c0_i32_0 : i32, i32
  }
  func.func @transform_2(%arg0: i32) -> (i32, i32) {
    %c0_i32 = arith.constant 0 : i32
    %c0_i32_0 = arith.constant 0 : i32
    %c0_i32_1 = arith.constant 0 : i32
    return %c0_i32, %c0_i32_0 : i32, i32
  }
  func.func @transform_3(%arg0: i32) -> (i32, i32) {
    %c0_i32 = arith.constant 0 : i32
    %c0_i32_0 = arith.constant 0 : i32
    %c0_i32_1 = arith.constant 0 : i32
    return %c0_i32, %c0_i32_0 : i32, i32
  }
  func.func @transform_4(%arg0: i32) -> (i32, i32) {
    %c0_i32 = arith.constant 0 : i32
    %c0_i32_0 = arith.constant 0 : i32
    %c0_i32_1 = arith.constant 0 : i32
    return %c0_i32, %c0_i32_0 : i32, i32
  }
  func.func @transform_5(%arg0: i32) -> (i32, i32) {
    %c0_i32 = arith.constant 0 : i32
    %c0_i32_0 = arith.constant 0 : i32
    return %arg0, %c0_i32 : i32, i32
  }
}

</mosaic_0001>

<llo_original>
// kernel: tpu_custom_call.1
$region0: #{tpu_custom_call.1}
  #allocation0 [shape = 'u32[]', space=smem, size = 0x4, offset = 0x4, fixed_abs, tag = 'smem constant byte address 0x4 - core index']
  #allocation1 [shape = 'u32[144,128]{1,0:T(1,128)}', space=vmem, size = 0x12000, scoped, tag = 'internal scratch']
  %s0 = inlined_call_operand.hbm [shape: f32[2,16], index: 0, kind: input, shape index: {}]
  %s1 = inlined_call_operand.hbm [shape: f32[16,256], index: 1, kind: input, shape index: {}]
  %s2 = inlined_call_operand.vmem [shape: f32[1,256], index: 2, kind: input, shape index: {}]
  %s3 = inlined_call_operand.hbm [shape: f32[256,128], index: 3, kind: input, shape index: {}]
  %s4 = inlined_call_operand.vmem [shape: f32[1,128], index: 4, kind: input, shape index: {}]
  %s5 = inlined_call_operand.hbm [shape: f32[2,128], index: 5, kind: output, shape index: {}]
  %s6 = sld [smem:[#allocation0]]
  $region42: #{tpu_custom_call.1} parent=0
    _
  %s8 = ssub.s32 1, %s6
  %s9 = scalar_select 0, %s8, %s6
  $region1: #{tpu_custom_call.1} parent=0
    #allocation2 [shape = 'u8[1024]{0}', space=vmem, size = 0x400, scoped, tag = 'input window, operand 0, single buffered']
    #allocation3 [shape = 's32[1]{0}', space=sflag, size = 0x4, scoped, tag = 'scoped memory for tpu_custom_call.1']
    #allocation4 [shape = 's32[1]{0}', space=sflag, size = 0x4, scoped, tag = 'scoped memory for tpu_custom_call.1']
    #allocation5 [shape = 'u8[16384]{0}', space=vmem, size = 0x4000, scoped, tag = 'input window, operand 1, single buffered']
    #allocation6 [shape = 's32[1]{0}', space=sflag, size = 0x4, scoped, tag = 'scoped memory for tpu_custom_call.1']
    #allocation7 [shape = 'u8[131072]{0}', space=vmem, size = 0x20000, scoped, tag = 'input window, operand 3, single buffered']
    #allocation8 [shape = 'u8[1024]{0}', space=vmem, size = 0x400, scoped, tag = 'output window, operand 0, single buffered']
    %10 = vsyncpa [#allocation3], 0
    %11 = vsyncpa [#allocation6], 0
    %12 = vsyncpa [#allocation4], 0
    // Predicated region
    $region2: #{tpu_custom_call.1} parent=1 // pred_check
      _
    $region3: #{tpu_custom_call.1} parent=1 // pred_check_branch
      %14 = sbr.rel (0) target = $region5
    $region4: #{tpu_custom_call.1} parent=1 // pred_region
      %s16 = ssub.s32 32, 32
      %17 = vsyncadd [#allocation3], %s16
      %s19 = sshll.u32 [#allocation2], 4
      %s20 = int_to_ptr.vmem [resolvable:$true] %s19
      %22 = dma.hbm_to_vmem [thread:$0]  %s0, 32, %s20, [#allocation3]
    $region5: #{tpu_custom_call.1} parent=1 // pred_fallthru
      _
    // Predicated region
    $region6: #{tpu_custom_call.1} parent=1 // pred_check
      _
    $region7: #{tpu_custom_call.1} parent=1 // pred_check_branch
      %24 = sbr.rel (0) target = $region9
    $region8: #{tpu_custom_call.1} parent=1 // pred_region
      %s26 = ssub.s32 512, 512
      %27 = vsyncadd [#allocation6], %s26
      %s28 = sshll.u32 [#allocation5], 4
      %s29 = int_to_ptr.vmem [resolvable:$true] %s28
      %34 = dma.hbm_to_vmem [thread:$0]  %s1, 512, %s29, [#allocation6], 256, 256, 16
    $region9: #{tpu_custom_call.1} parent=1 // pred_fallthru
      _
    // Predicated region
    $region10: #{tpu_custom_call.1} parent=1 // pred_check
      _
    $region11: #{tpu_custom_call.1} parent=1 // pred_check_branch
      %36 = sbr.rel (0) target = $region13
    $region12: #{tpu_custom_call.1} parent=1 // pred_region
      _
    $region13: #{tpu_custom_call.1} parent=1 // pred_fallthru
      _
    // Predicated region
    $region14: #{tpu_custom_call.1} parent=1 // pred_check
      _
    $region15: #{tpu_custom_call.1} parent=1 // pred_check_branch
      %38 = sbr.rel (0) target = $region17
    $region16: #{tpu_custom_call.1} parent=1 // pred_region
      %s40 = ssub.s32 4096, 4096
      %41 = vsyncadd [#allocation6], %s40
      %s42 = sshll.u32 [#allocation7], 4
      %s43 = int_to_ptr.vmem [resolvable:$true] %s42
      %48 = dma.hbm_to_vmem [thread:$0]  %s3, 4096, %s43, [#allocation6], 128, 128, 8
    $region17: #{tpu_custom_call.1} parent=1 // pred_fallthru
      _
    // Predicated region
    $region18: #{tpu_custom_call.1} parent=1 // pred_check
      _
    $region19: #{tpu_custom_call.1} parent=1 // pred_check_branch
      %50 = sbr.rel (0) target = $region21
    $region20: #{tpu_custom_call.1} parent=1 // pred_region
      _
    $region21: #{tpu_custom_call.1} parent=1 // pred_fallthru
      _
    // Predicated region
    $region22: #{tpu_custom_call.1} parent=1 // pred_check
      _
    $region23: #{tpu_custom_call.1} parent=1 // pred_check_branch
      %52 = sbr.rel (0) target = $region25
    $region24: #{tpu_custom_call.1} parent=1 // pred_region
      %53 = dma.done [#allocation3], 32
    $region25: #{tpu_custom_call.1} parent=1 // pred_fallthru
      _
    // Predicated region
    $region26: #{tpu_custom_call.1} parent=1 // pred_check
      _
    $region27: #{tpu_custom_call.1} parent=1 // pred_check_branch
      %55 = sbr.rel (0) target = $region29
    $region28: #{tpu_custom_call.1} parent=1 // pred_region
      %56 = dma.done [#allocation6], 512
    $region29: #{tpu_custom_call.1} parent=1 // pred_fallthru
      _
    // Predicated region
    $region30: #{tpu_custom_call.1} parent=1 // pred_check
      _
    $region31: #{tpu_custom_call.1} parent=1 // pred_check_branch
      %58 = sbr.rel (0) target = $region33
    $region32: #{tpu_custom_call.1} parent=1 // pred_region
      %59 = dma.done [#allocation6], 4096
    $region33: #{tpu_custom_call.1} parent=1 // pred_fallthru
      _
    %v60 = vld [vmem:[#allocation2] sm:$0x3]
    %v61 = vld [vmem:[#allocation5] sm:$0xff]
    %v62 = vld [vmem:[#allocation5 + $0x8] sm:$0xff]
    %v63 = vld [vmem:[#allocation5 + $0x10] sm:$0xff]
    %v64 = vld [vmem:[#allocation5 + $0x18] sm:$0xff]
    %v65 = vld [vmem:[%s2] sm:$0x3]
    %v67 = vlaneseq
    %v68 = vshrl.u32 %v67, 7
    %v69 = vsub.s32 0, %v68
    %v70 = vrot.slane %v65, %v69
    %v71 = vlaneseq
    %v72 = vshrl.u32 %v71, 7
    %v73 = vsub.s32 1, %v72
    %v74 = vrot.slane %v65, %v73
    %vm77 = vcmask 130048
    %v79 = vsel %vm77, %v60, 0
    %81 = vmatprep.subr.mxu0 %v62
    %82 = vmatpush1.msra.mxu0 %v61
    %83 = vmatprep.subr.mxu0 %v64
    %84 = vmatpush1.msra.mxu0 %v63
    %85 = vmatprep.subr.mxu0 0.0
    %86 = vmatpush1.msra.mxu0 0.0
    %87 = vmatprep.subr.mxu0 0.0
    %88 = vmatpush1.msra.mxu0 0.0
    %89 = vmatprep.subr.mxu0 0.0
    %90 = vmatpush1.msra.mxu0 0.0
    %91 = vmatprep.subr.mxu0 0.0
    %92 = vmatpush1.msra.mxu0 0.0
    %93 = vmatprep.subr.mxu0 0.0
    %94 = vmatpush1.msra.mxu0 0.0
    %95 = vmatprep.subr.mxu0 0.0
    %96 = vmatpush1.msra.mxu0 0.0
    %97 = vmatprep.subr.mxu0 0.0
    %98 = vmatpush1.msra.mxu0 0.0
    %99 = vmatprep.subr.mxu0 0.0
    %100 = vmatpush1.msra.mxu0 0.0
    %101 = vmatprep.subr.mxu0 0.0
    %102 = vmatpush1.msra.mxu0 0.0
    %103 = vmatprep.subr.mxu0 0.0
    %104 = vmatpush1.msra.mxu0 0.0
    %105 = vmatprep.subr.mxu0 0.0
    %106 = vmatpush1.msra.mxu0 0.0
    %107 = vmatprep.subr.mxu0 0.0
    %108 = vmatpush1.msra.mxu0 0.0
    %109 = vmatprep.subr.mxu0 0.0
    %110 = vmatpush1.msra.mxu0 0.0
    %111 = vmatprep.subr.mxu0 0.0
    %112 = vmatpush1.msra.mxu0 0.0
    %113 = vmatprep.subr.mxu0 0.0
    %114 = vmatpush1.msra.mxu0 0.0
    %115 = vmatprep.subr.mxu0 0.0
    %116 = vmatpush1.msra.mxu0 0.0
    %117 = vmatprep.subr.mxu0 0.0
    %118 = vmatpush1.msra.mxu0 0.0
    %119 = vmatprep.subr.mxu0 0.0
    %120 = vmatpush1.msra.mxu0 0.0
    %121 = vmatprep.subr.mxu0 0.0
    %122 = vmatpush1.msra.mxu0 0.0
    %123 = vmatprep.subr.mxu0 0.0
    %124 = vmatpush1.msra.mxu0 0.0
    %125 = vmatprep.subr.mxu0 0.0
    %126 = vmatpush1.msra.mxu0 0.0
    %127 = vmatprep.subr.mxu0 0.0
    %128 = vmatpush1.msra.mxu0 0.0
    %129 = vmatprep.subr.mxu0 0.0
    %130 = vmatpush1.msra.mxu0 0.0
    %131 = vmatprep.subr.mxu0 0.0
    %132 = vmatpush1.msra.mxu0 0.0
    %133 = vmatprep.subr.mxu0 0.0
    %134 = vmatpush1.msra.mxu0 0.0
    %135 = vmatprep.subr.mxu0 0.0
    %136 = vmatpush1.msra.mxu0 0.0
    %137 = vmatprep.subr.mxu0 0.0
    %138 = vmatpush1.msra.mxu0 0.0
    %139 = vmatprep.subr.mxu0 0.0
    %140 = vmatpush1.msra.mxu0 0.0
    %141 = vmatprep.subr.mxu0 0.0
    %142 = vmatpush1.msra.mxu0 0.0
    %143 = vmatprep.subr.mxu0 0.0
    %144 = vmatpush1.msra.mxu0 0.0
    %145 = vmatprep.mubr.f32.mxu0 0.0
    %146 = vmatmul.mubr.f32.gmra.mrb[0].mxu0 %v79
    %v147 = vpop.f32.mrb[0].mxu0
    %v148 = vadd.f32 %v70, %v147
    %v149 = vpop.f32.mrb[0].mxu0
    %v150 = vadd.f32 %v74, %v149
    %151 = vdwg.mxu0
    %v152 = vtanh.pop %v148
    %v153 = vtanh.pop %v150
    %v154 = vld [vmem:[#allocation7] sm:$0xff]
    %v155 = vld [vmem:[#allocation7 + $0x8] sm:$0xff]
    %v156 = vld [vmem:[#allocation7 + $0x10] sm:$0xff]
    %v157 = vld [vmem:[#allocation7 + $0x18] sm:$0xff]
    %v158 = vld [vmem:[#allocation7 + $0x20] sm:$0xff]
    %v159 = vld [vmem:[#allocation7 + $0x28] sm:$0xff]
    %v160 = vld [vmem:[#allocation7 + $0x30] sm:$0xff]
    %v161 = vld [vmem:[#allocation7 + $0x38] sm:$0xff]
    %v162 = vld [vmem:[#allocation7 + $0x40] sm:$0xff]
    %v163 = vld [vmem:[#allocation7 + $0x48] sm:$0xff]
    %v164 = vld [vmem:[#allocation7 + $0x50] sm:$0xff]
    %v165 = vld [vmem:[#allocation7 + $0x58] sm:$0xff]
    %v166 = vld [vmem:[#allocation7 + $0x60] sm:$0xff]
    %v167 = vld [vmem:[#allocation7 + $0x68] sm:$0xff]
    %v168 = vld [vmem:[#allocation7 + $0x70] sm:$0xff]
    %v169 = vld [vmem:[#allocation7 + $0x78] sm:$0xff]
    %v170 = vld [vmem:[#allocation7 + $0x80] sm:$0xff]
    %v171 = vld [vmem:[#allocation7 + $0x88] sm:$0xff]
    %v172 = vld [vmem:[#allocation7 + $0x90] sm:$0xff]
    %v173 = vld [vmem:[#allocation7 + $0x98] sm:$0xff]
    %v174 = vld [vmem:[#allocation7 + $0xa0] sm:$0xff]
    %v175 = vld [vmem:[#allocation7 + $0xa8] sm:$0xff]
    %v176 = vld [vmem:[#allocation7 + $0xb0] sm:$0xff]
    %v177 = vld [vmem:[#allocation7 + $0xb8] sm:$0xff]
    %v178 = vld [vmem:[#allocation7 + $0xc0] sm:$0xff]
    %v179 = vld [vmem:[#allocation7 + $0xc8] sm:$0xff]
    %v180 = vld [vmem:[#allocation7 + $0xd0] sm:$0xff]
    %v181 = vld [vmem:[#allocation7 + $0xd8] sm:$0xff]
    %v182 = vld [vmem:[#allocation7 + $0xe0] sm:$0xff]
    %v183 = vld [vmem:[#allocation7 + $0xe8] sm:$0xff]
    %v184 = vld [vmem:[#allocation7 + $0xf0] sm:$0xff]
    %v185 = vld [vmem:[#allocation7 + $0xf8] sm:$0xff]
    %v186 = vld [vmem:[%s4] sm:$0x1]
    %v188 = vlaneseq
    %v189 = vshrl.u32 %v188, 7
    %v190 = vsub.s32 0, %v189
    %v191 = vrot.slane %v186, %v190
    %193 = vmatprep.subr.mxu0 0.0
    %194 = vmatpush1.msra.mxu0 %v154
    %195 = vmatprep.subr.mxu0 0.0
    %196 = vmatpush1.msra.mxu0 %v155
    %197 = vmatprep.subr.mxu0 0.0
    %198 = vmatpush1.msra.mxu0 %v156
    %199 = vmatprep.subr.mxu0 0.0
    %200 = vmatpush1.msra.mxu0 %v157
    %201 = vmatprep.subr.mxu0 0.0
    %202 = vmatpush1.msra.mxu0 %v158
    %203 = vmatprep.subr.mxu0 0.0
    %204 = vmatpush1.msra.mxu0 %v159
    %205 = vmatprep.subr.mxu0 0.0
    %206 = vmatpush1.msra.mxu0 %v160
    %207 = vmatprep.subr.mxu0 0.0
    %208 = vmatpush1.msra.mxu0 %v161
    %209 = vmatprep.subr.mxu0 0.0
    %210 = vmatpush1.msra.mxu0 %v162
    %211 = vmatprep.subr.mxu0 0.0
    %212 = vmatpush1.msra.mxu0 %v163
    %213 = vmatprep.subr.mxu0 0.0
    %214 = vmatpush1.msra.mxu0 %v164
    %215 = vmatprep.subr.mxu0 0.0
    %216 = vmatpush1.msra.mxu0 %v165
    %217 = vmatprep.subr.mxu0 0.0
    %218 = vmatpush1.msra.mxu0 %v166
    %219 = vmatprep.subr.mxu0 0.0
    %220 = vmatpush1.msra.mxu0 %v167
    %221 = vmatprep.subr.mxu0 0.0
    %222 = vmatpush1.msra.mxu0 %v168
    %223 = vmatprep.subr.mxu0 0.0
    %224 = vmatpush1.msra.mxu0 %v169
    %225 = vmatprep.subr.mxu0 0.0
    %226 = vmatpush1.msra.mxu0 %v170
    %227 = vmatprep.subr.mxu0 0.0
    %228 = vmatpush1.msra.mxu0 %v171
    %229 = vmatprep.subr.mxu0 0.0
    %230 = vmatpush1.msra.mxu0 %v172
    %231 = vmatprep.subr.mxu0 0.0
    %232 = vmatpush1.msra.mxu0 %v173
    %233 = vmatprep.subr.mxu0 0.0
    %234 = vmatpush1.msra.mxu0 %v174
    %235 = vmatprep.subr.mxu0 0.0
    %236 = vmatpush1.msra.mxu0 %v175
    %237 = vmatprep.subr.mxu0 0.0
    %238 = vmatpush1.msra.mxu0 %v176
    %239 = vmatprep.subr.mxu0 0.0
    %240 = vmatpush1.msra.mxu0 %v177
    %241 = vmatprep.subr.mxu0 0.0
    %242 = vmatpush1.msra.mxu0 %v178
    %243 = vmatprep.subr.mxu0 0.0
    %244 = vmatpush1.msra.mxu0 %v179
    %245 = vmatprep.subr.mxu0 0.0
    %246 = vmatpush1.msra.mxu0 %v180
    %247 = vmatprep.subr.mxu0 0.0
    %248 = vmatpush1.msra.mxu0 %v181
    %249 = vmatprep.subr.mxu0 0.0
    %250 = vmatpush1.msra.mxu0 %v182
    %251 = vmatprep.subr.mxu0 0.0
    %252 = vmatpush1.msra.mxu0 %v183
    %253 = vmatprep.subr.mxu0 0.0
    %254 = vmatpush1.msra.mxu0 %v184
    %255 = vmatprep.subr.mxu0 0.0
    %256 = vmatpush1.msra.mxu0 %v185
    %257 = vmatprep.mubr.f32.mxu0 %v153
    %258 = vmatmul.mubr.f32.gmra.mrb[0].mxu0 %v152
    %v259 = vpop.f32.mrb[0].mxu0
    %v260 = vadd.f32 %v191, %v259
    %v261 = vpop.f32.mrb[0].mxu0
    %262 = vdwg.mxu0
    %263 = vst [vmem:[#allocation8] sm:$0x3] %v260
    // Predicated region
    $region34: #{tpu_custom_call.1} parent=1 // pred_check
      _
    $region35: #{tpu_custom_call.1} parent=1 // pred_check_branch
      %265 = sbr.rel (0) target = $region37
    $region36: #{tpu_custom_call.1} parent=1 // pred_region
      %s267 = ssub.s32 32, 32
      %268 = vsyncadd [#allocation4], %s267
      %s270 = sshll.u32 [#allocation8], 4
      %s271 = int_to_ptr.vmem [resolvable:$true] %s270
      %273 = dma.vmem_to_hbm [thread:$0]  %s271, 32, %s5, [#allocation4]
    $region37: #{tpu_custom_call.1} parent=1 // pred_fallthru
      _
    // Predicated region
    $region38: #{tpu_custom_call.1} parent=1 // pred_check
      _
    $region39: #{tpu_custom_call.1} parent=1 // pred_check_branch
      %275 = sbr.rel (0) target = $region41
    $region40: #{tpu_custom_call.1} parent=1 // pred_region
      %276 = dma.done [#allocation4], 32
    $region41: #{tpu_custom_call.1} parent=1 // pred_fallthru
      _
    %277 = vsyncpa [#allocation3], 1
    %278 = vsyncpa [#allocation6], 1
    %279 = vsyncpa [#allocation4], 1

</llo_original>
